<compile_context>
chip_gen: v7x
topology: tpu7x:2x2x1
jax: 0.10.0
libtpu: 0.0.40
codegen_flags: <defaults>
</compile_context>

<pallas_src>
import functools

import jax
import jax.numpy as jnp
import numpy as np
from jax.experimental import pallas as pl
from jax.experimental.pallas import tpu as pltpu


def _round_up(v, m):
    return ((v + m - 1) // m) * m


def ffn_kernel(x_ref, w1_ref, b1_ref, w2_ref, b2_ref, o_ref, acc_ref):
    k = pl.program_id(1)

    @pl.when(k == 0)
    def _():
        acc_ref[...] = jnp.zeros_like(acc_ref)

    # Matmul 1 on MXU (bf16 operands, f32 accumulation); bias + ReLU in f32 (VPU).
    x = x_ref[...].astype(w1_ref.dtype)          # in-kernel cast: no extra HBM pass
    h = jnp.dot(x, w1_ref[...], preferred_element_type=jnp.float32)
    h = jnp.maximum(h + b1_ref[...], 0.0)        # (TM, TDf) + (1, TDf) broadcast
    # Matmul 2 on MXU, accumulated over the streamed ffnn_dim panels.
    acc_ref[...] += jnp.dot(h.astype(w2_ref.dtype), w2_ref[...],
                            preferred_element_type=jnp.float32)

    @pl.when(k == pl.num_programs(1) - 1)
    def _():
        o_ref[...] = (acc_ref[...] + b2_ref[...]).astype(o_ref.dtype)


def prepare_params(w1, b1, w2, b2, compute_dtype=jnp.bfloat16):
    """Pad (lane-dense; zero rows/cols are mathematically exact for this FFN)
    and cast ONCE at parameter init.  Reuse the result for every forward call."""
    Dm, Df = w1.shape
    De = w2.shape[1]
    Df_p = _round_up(Df, 128)
    De_p = _round_up(De, 128)
    w1p = jnp.pad(w1, ((0, 0), (0, Df_p - Df))).astype(compute_dtype)
    w2p = jnp.pad(w2, ((0, Df_p - Df), (0, De_p - De))).astype(compute_dtype)
    b1p = jnp.pad(b1, (0, Df_p - Df)).astype(jnp.float32).reshape(1, Df_p)
    b2p = jnp.pad(b2, (0, De_p - De)).astype(jnp.float32).reshape(1, De_p)
    return w1p, b1p, w2p, b2p


def _vmem_estimate(TM, Dm, TDf, De_p, x_isz, w_isz, out_isz):
    xb   = TM * Dm * x_isz               # x row tile
    w1b  = Dm * TDf * w_isz              # streamed w1 column panel
    b1b  = TDf * 4
    w2b  = TDf * De_p * w_isz            # streamed w2 row panel
    b2b  = De_p * 4
    outb = TM * De_p * out_isz
    acc  = TM * De_p * 4                 # f32 accumulator scratch (single buffer)
    hb   = TM * TDf * (4 + w_isz)        # f32 h + bf16 copy between the two dots
    return 2 * (xb + w1b + b1b + w2b + b2b + outb) + acc + hb


@functools.partial(jax.jit,
                   static_argnames=("embed_dim", "tm_max", "min_row_tiles"))
def linear_transform_sublayer(x, w1p, b1p, w2p, b2p, *, embed_dim,
                              tm_max=512, min_row_tiles=2):
    """x: (batch, seq, model_dim) -> (batch, seq, embed_dim).
    w1p/b1p/w2p/b2p must come from prepare_params() (pre-padded, pre-cast)."""
    B, S, Dm = x.shape
    Df_p = w1p.shape[1]
    De_p = w2p.shape[1]
    De = embed_dim
    M = B * S

    # ---- Row tile: minimal padding, >= min_row_tiles steps (v7x megacore). ----
    M8 = _round_up(M, 8)
    n_row = max(min_row_tiles, -(-M8 // tm_max))
    TM = _round_up(-(-M8 // n_row), 8)
    M_p = TM * n_row

    # ---- ffnn_dim panel: largest 128-multiple divisor of Df_p fitting VMEM. ----
    x_isz = jnp.dtype(x.dtype).itemsize
    w_isz = jnp.dtype(w1p.dtype).itemsize
    out_isz = x_isz
    budget = 40 * 1024 * 1024
    TDf = 128
    for cand in range(Df_p, 0, -128):
        if Df_p % cand == 0 and _vmem_estimate(
                TM, Dm, cand, De_p, x_isz, w_isz, out_isz) <= budget:
            TDf = cand
            break
    n_k = Df_p // TDf

    x2d = x.reshape(M, Dm)
    if M_p != M:
        # Padded rows produce garbage (ReLU(b1) @ w2 + b2); sliced off below.
        x2d = jnp.pad(x2d, ((0, M_p - M), (0, 0)))

    est = _vmem_estimate(TM, Dm, TDf, De_p, x_isz, w_isz, out_isz)
    vmem_limit = min(max(int(est * 1.5) + (1 << 20), 16 * 1024 * 1024),
                     48 * 1024 * 1024)               # stays < v7x's 64 MiB VMEM

    flops = 2 * M_p * (Dm * Df_p + Df_p * De_p)
    bytes_accessed = (M_p * Dm * x_isz                          # x
                      + n_row * (Dm * Df_p + Df_p * De_p) * w_isz  # weights/row tile
                      + n_row * (Df_p + De_p) * 4               # biases
                      + M_p * De_p * out_isz)                   # output writeback

    out2d = pl.pallas_call(
        ffn_kernel,
        out_shape=jax.ShapeDtypeStruct((M_p, De_p), x.dtype),
        grid=(n_row, n_k),
        in_specs=[
            pl.BlockSpec((TM, Dm), lambda i, k: (i, 0)),      # x row tile (k-invariant)
            pl.BlockSpec((Dm, TDf), lambda i, k: (0, k)),     # w1 column panel
            pl.BlockSpec((1, TDf), lambda i, k: (0, k)),      # bias 1 panel (f32)
            pl.BlockSpec((TDf, De_p), lambda i, k: (k, 0)),   # w2 row panel
            pl.BlockSpec((1, De_p), lambda i, k: (0, 0)),     # bias 2 (constant, f32)
        ],
        out_specs=pl.BlockSpec((TM, De_p), lambda i, k: (i, 0)),
        scratch_shapes=[pltpu.VMEM((TM, De_p), jnp.float32)],  # f32 accumulator
        compiler_params=pltpu.CompilerParams(
            dimension_semantics=("parallel", "arbitrary"),
            vmem_limit_bytes=vmem_limit),
        cost_estimate=pl.CostEstimate(
            flops=flops, transcendentals=0, bytes_accessed=bytes_accessed),
    )(x2d, w1p, b1p, w2p, b2p)

    # Padded rows/cols of out2d must never be consumed directly -> slice them off.
    return out2d[:M, :De].reshape(B, S, De)


if __name__ == "__main__":
    # Config: model_dim=32, ffnn_dim=64, embed_dim=32
    model_dim, ffnn_dim, embed_dim = 32, 64, 32
    batch, seq = 2, 8

    key = jax.random.PRNGKey(0)
    kx, kw1, kb1, kw2, kb2 = jax.random.split(key, 5)

    # Deterministic param init (PyTorch-style uniform(-1/sqrt(fan_in), ...))
    lim1 = 1.0 / np.sqrt(model_dim)
    lim2 = 1.0 / np.sqrt(ffnn_dim)
    w1 = jax.random.uniform(kw1, (model_dim, ffnn_dim), jnp.float32, -lim1, lim1)
    b1 = jax.random.uniform(kb1, (ffnn_dim,), jnp.float32, -lim1, lim1)
    w2 = jax.random.uniform(kw2, (ffnn_dim, embed_dim), jnp.float32, -lim2, lim2)
    b2 = jax.random.uniform(kb2, (embed_dim,), jnp.float32, -lim2, lim2)

    x = jax.random.normal(kx, (batch, seq, model_dim), jnp.float32)

    # Pad/cast parameters ONCE (hoisted out of the forward path).
    w1p, b1p, w2p, b2p = prepare_params(w1, b1, w2, b2)

    out = linear_transform_sublayer(x, w1p, b1p, w2p, b2p, embed_dim=embed_dim)
    out = jax.block_until_ready(out)
    assert out.shape == (batch, seq, embed_dim)

    # Pure-JAX f32 reference (bf16 MXU operands -> loose tolerance).
    ref_f32 = jnp.maximum(x @ w1 + b1, 0.0) @ w2 + b2
    np.testing.assert_allclose(np.asarray(out), np.asarray(ref_f32),
                               rtol=3e-2, atol=3e-2)

    # Matched-precision reference (bf16 operands, f32 accumulation) — tighter.
    bf = jnp.bfloat16
    h_ref = jnp.maximum(
        jnp.dot(x.reshape(-1, model_dim).astype(bf), w1.astype(bf),
                preferred_element_type=jnp.float32) + b1, 0.0)
    ref_bf = (jnp.dot(h_ref.astype(bf), w2.astype(bf),
                      preferred_element_type=jnp.float32) + b2
              ).reshape(batch, seq, embed_dim)
    np.testing.assert_allclose(np.asarray(out), np.asarray(ref_bf),
                               rtol=1e-3, atol=1e-3)

    print("KERNEL_OK")
</pallas_src>

<mosaic_0001>
module attributes {stable_mosaic.version = 11 : i64} {
  func.func @ffn_kernel(%arg0: i32, %arg1: i32, %arg2: memref<8x32xf32, #tpu.memory_space<vmem>>, %arg3: memref<32x128xbf16, #tpu.memory_space<vmem>>, %arg4: memref<1x128xf32, #tpu.memory_space<vmem>>, %arg5: memref<128x128xbf16, #tpu.memory_space<vmem>>, %arg6: memref<1x128xf32, #tpu.memory_space<vmem>>, %arg7: memref<8x128xf32, #tpu.memory_space<vmem>>, %arg8: memref<8x128xf32, #tpu.memory_space<vmem>>) attributes {dimension_semantics = [#tpu.dimension_semantics<parallel>, #tpu.dimension_semantics<arbitrary>], iteration_bounds = array<i64: 2, 1>, scalar_prefetch = 0 : i64, scratch_operands = 1 : i64, tpu.core_type = #tpu.core_type<tc>, window_params = [{transform_indices = @transform_0, window_bounds = array<i64: 8, 32>}, {transform_indices = @transform_1, window_bounds = array<i64: 32, 128>}, {transform_indices = @transform_2, window_bounds = array<i64: 1, 128>}, {transform_indices = @transform_3, window_bounds = array<i64: 128, 128>}, {pipeline_mode = #tpu.pipeline_mode<synchronous>, transform_indices = @transform_4, window_bounds = array<i64: 1, 128>}, {transform_indices = @transform_5, window_bounds = array<i64: 8, 128>}]} {
    %c0_i32 = arith.constant 0 : i32
    %0 = arith.cmpi eq, %arg1, %c0_i32 : i32
    %1 = arith.extui %0 : i1 to i32
    %c0_i32_0 = arith.constant 0 : i32
    %2 = arith.cmpi ne, %1, %c0_i32_0 : i32
    scf.if %2 {
      %cst_16 = arith.constant 0.000000e+00 : f32
      %21 = vector.broadcast %cst_16 : f32 to vector<8x128xf32>
      %c0_17 = arith.constant 0 : index
      %c0_18 = arith.constant 0 : index
      %22 = vector.load %arg8[%c0_17, %c0_18] : memref<8x128xf32, #tpu.memory_space<vmem>>, vector<8x128xf32>
      tpu.vector_store %arg8[%c0_17, %c0_18], %21 {strides = array<i32>} : memref<8x128xf32, #tpu.memory_space<vmem>>, vector<8x128xf32>,
    } else {
    }
    %c0 = arith.constant 0 : index
    %c0_1 = arith.constant 0 : index
    %3 = vector.load %arg2[%c0, %c0_1] : memref<8x32xf32, #tpu.memory_space<vmem>>, vector<8x32xf32>
    %4 = arith.truncf %3 : vector<8x32xf32> to vector<8x32xbf16>
    %c0_2 = arith.constant 0 : index
    %c0_3 = arith.constant 0 : index
    %5 = vector.load %arg3[%c0_2, %c0_3] : memref<32x128xbf16, #tpu.memory_space<vmem>>, vector<32x128xbf16>
    %cst = arith.constant dense<0.000000e+00> : vector<8x128xf32>
    %6 = tpu.matmul %4, %5, %cst {dimension_numbers = #tpu.dot_dimension_numbers<[1], [0], [0], [1], [0, 0, 1, 1], [], []>} : vector<8x32xbf16>, vector<32x128xbf16>, vector<8x128xf32> -> vector<8x128xf32>
    %c0_4 = arith.constant 0 : index
    %c0_5 = arith.constant 0 : index
    %7 = vector.load %arg4[%c0_4, %c0_5] : memref<1x128xf32, #tpu.memory_space<vmem>>, vector<1x128xf32>
    %8 = vector.broadcast %7 : vector<1x128xf32> to vector<8x128xf32>
    %9 = arith.addf %6, %8 : vector<8x128xf32>
    %cst_6 = arith.constant 0.000000e+00 : f32
    %10 = vector.broadcast %cst_6 : f32 to vector<8x128xf32>
    %11 = arith.maximumf %9, %10 : vector<8x128xf32>
    %c0_7 = arith.constant 0 : index
    %c0_8 = arith.constant 0 : index
    %12 = vector.load %arg8[%c0_7, %c0_8] : memref<8x128xf32, #tpu.memory_space<vmem>>, vector<8x128xf32>
    %13 = arith.truncf %11 : vector<8x128xf32> to vector<8x128xbf16>
    %c0_9 = arith.constant 0 : index
    %c0_10 = arith.constant 0 : index
    %14 = vector.load %arg5[%c0_9, %c0_10] : memref<128x128xbf16, #tpu.memory_space<vmem>>, vector<128x128xbf16>
    %cst_11 = arith.constant dense<0.000000e+00> : vector<8x128xf32>
    %15 = tpu.matmul %13, %14, %cst_11 {dimension_numbers = #tpu.dot_dimension_numbers<[1], [0], [0], [1], [0, 0, 1, 1], [], []>} : vector<8x128xbf16>, vector<128x128xbf16>, vector<8x128xf32> -> vector<8x128xf32>
    %16 = arith.addf %12, %15 : vector<8x128xf32>
    %c0_12 = arith.constant 0 : index
    %c0_13 = arith.constant 0 : index
    %17 = vector.load %arg8[%c0_12, %c0_13] : memref<8x128xf32, #tpu.memory_space<vmem>>, vector<8x128xf32>
    tpu.vector_store %arg8[%c0_12, %c0_13], %16 {strides = array<i32>} : memref<8x128xf32, #tpu.memory_space<vmem>>, vector<8x128xf32>,
    %c0_i32_14 = arith.constant 0 : i32
    %18 = arith.cmpi eq, %arg1, %c0_i32_14 : i32
    %19 = arith.extui %18 : i1 to i32
    %c0_i32_15 = arith.constant 0 : i32
    %20 = arith.cmpi ne, %19, %c0_i32_15 : i32
    scf.if %20 {
      %c0_16 = arith.constant 0 : index
      %c0_17 = arith.constant 0 : index
      %21 = vector.load %arg8[%c0_16, %c0_17] : memref<8x128xf32, #tpu.memory_space<vmem>>, vector<8x128xf32>
      %c0_18 = arith.constant 0 : index
      %c0_19 = arith.constant 0 : index
      %22 = vector.load %arg6[%c0_18, %c0_19] : memref<1x128xf32, #tpu.memory_space<vmem>>, vector<1x128xf32>
      %23 = vector.broadcast %22 : vector<1x128xf32> to vector<8x128xf32>
      %24 = arith.addf %21, %23 : vector<8x128xf32>
      %c0_20 = arith.constant 0 : index
      %c0_21 = arith.constant 0 : index
      %25 = vector.load %arg7[%c0_20, %c0_21] : memref<8x128xf32, #tpu.memory_space<vmem>>, vector<8x128xf32>
      tpu.vector_store %arg7[%c0_20, %c0_21], %24 {strides = array<i32>} : memref<8x128xf32, #tpu.memory_space<vmem>>, vector<8x128xf32>,
    } else {
    }
    return
  }
  func.func @transform_0(%arg0: i32, %arg1: i32) -> (i32, i32) {
    %c0_i32 = arith.constant 0 : i32
    %c0_i32_0 = arith.constant 0 : i32
    return %arg0, %c0_i32 : i32, i32
  }
  func.func @transform_1(%arg0: i32, %arg1: i32) -> (i32, i32) {
    %c0_i32 = arith.constant 0 : i32
    %c0_i32_0 = arith.constant 0 : i32
    return %c0_i32, %arg1 : i32, i32
  }
  func.func @transform_2(%arg0: i32, %arg1: i32) -> (i32, i32) {
    %c0_i32 = arith.constant 0 : i32
    %c0_i32_0 = arith.constant 0 : i32
    return %c0_i32, %arg1 : i32, i32
  }
  func.func @transform_3(%arg0: i32, %arg1: i32) -> (i32, i32) {
    %c0_i32 = arith.constant 0 : i32
    %c0_i32_0 = arith.constant 0 : i32
    return %arg1, %c0_i32 : i32, i32
  }
  func.func @transform_4(%arg0: i32, %arg1: i32) -> (i32, i32) {
    %c0_i32 = arith.constant 0 : i32
    %c0_i32_0 = arith.constant 0 : i32
    %c0_i32_1 = arith.constant 0 : i32
    return %c0_i32, %c0_i32_0 : i32, i32
  }
  func.func @transform_5(%arg0: i32, %arg1: i32) -> (i32, i32) {
    %c0_i32 = arith.constant 0 : i32
    %c0_i32_0 = arith.constant 0 : i32
    return %arg0, %c0_i32 : i32, i32
  }
}

</mosaic_0001>

<llo_original>
// kernel: linear_transform_sublayer.1
$region0: #{linear_transform_sublayer.1}
  #allocation0 [shape = 'u32[]', space=smem, size = 0x4, offset = 0x4, fixed_abs, tag = 'smem constant byte address 0x4 - core index']
  #allocation1 [shape = 'u32[144,128]{1,0:T(1,128)}', space=vmem, size = 0x12000, scoped, tag = 'internal scratch']
  #allocation2 [shape = 'f32[8,128]{1,0:T(8,128)}', space=vmem, size = 0x1000, scoped, tag = 'scratch operand']
  %s0 = inlined_call_operand.hbm [shape: f32[16,32], index: 0, kind: input, shape index: {}]
  %s1 = inlined_call_operand.hbm [shape: bf16[32,128], index: 1, kind: input, shape index: {}]
  %s2 = inlined_call_operand.vmem [shape: f32[1,128], index: 2, kind: input, shape index: {}]
  %s3 = inlined_call_operand.hbm [shape: bf16[128,128], index: 3, kind: input, shape index: {}]
  %s4 = inlined_call_operand.vmem [shape: f32[1,128], index: 4, kind: input, shape index: {}]
  %s5 = inlined_call_operand.vmem [shape: f32[16,128], index: 5, kind: output, shape index: {}]
  %s6 = sld [smem:[#allocation0]]
  $region73: #{linear_transform_sublayer.1} parent=0
    _
  %s8 = ssub.s32 1, %s6
  %s9 = scalar_select 0, %s8, %s6
  $region1: #{linear_transform_sublayer.1} parent=0
    #allocation3 [shape = 'u8[8192]{0}', space=vmem, size = 0x2000, scoped, tag = 'input window, operand 0']
    #allocation4 [shape = 's32[2]{0}', space=sflag, size = 0x8, scoped, tag = 'scoped memory for linear_transform_sublayer.1']
    #allocation5 [shape = 'u8[8192]{0}', space=vmem, size = 0x2000, scoped, tag = 'input window, operand 1, single buffered']
    #allocation6 [shape = 's32[1]{0}', space=sflag, size = 0x4, scoped, tag = 'scoped memory for linear_transform_sublayer.1']
    #allocation7 [shape = 'u8[32768]{0}', space=vmem, size = 0x8000, scoped, tag = 'input window, operand 3, single buffered']
    %10 = vsyncpa [#allocation4], 0
    %s11 = scalar_lea.sflag [#allocation4], 1
    %12 = vsyncpa %s11, 0
    %13 = vsyncpa [#allocation6], 0
    loop: start=0, step=1, limit=4
    $region2: #{linear_transform_sublayer.1} parent=1 // loop_pre_header
      _
    $region3: #{linear_transform_sublayer.1} parent=1 // loop_header
      %s15 = sphi 0, %s19
      %p16 = scmp.ge.s32.totalorder %s15, 4
      %s22 = sphi 0, %s34
      %s23 = sphi 0, %s30
      %s24 = sphi 0, %s22
      %s25 = sphi 0, %s23
      %s26 = sphi 0, %s24
      %s27 = sphi 0, %s25
      %s37 = sphi 0, %s39
      %s40 = sphi 0, %s37
      %s41 = sphi 0, %s40
      %s57 = sphi 0, %s41
      %s63 = sphi 0, %s65
      %s66 = sphi 0, %s63
      %s67 = sphi 0, %s66
      %s83 = sphi 0, %s67
      %s89 = sphi 0, %s91
      %s92 = sphi 0, %s89
      %s93 = sphi 0, %s92
      %s109 = sphi 0, %s93
      %s115 = sphi 0, %s117
      %s118 = sphi 0, %s115
      %s119 = sphi 0, %s118
      %s135 = sphi 0, %s119
      %s139 = sphi 0, %s139
      %s141 = sphi 0, %s139
      %s142 = sphi 0, %s141
      %s156 = sphi 0, %s142
      %s162 = sphi 0, %s164
      %s165 = sphi 0, %s162
      %s166 = sphi 0, %s165
      %s182 = sphi 0, %s166
    $region4: #{linear_transform_sublayer.1} parent=1 // loop_header_branch
      %18 = sbr.rel (%p16) target = $region8
    $region5: #{linear_transform_sublayer.1} parent=1 // loop_body
      %s20 = ssub.s32 %s15, 1
      %s21 = ssub.s32 %s15, 2
      %s28 = sadd.s32 1, %s23
      %p29 = scmp.ge.s32.totalorder %s28, 1
      %s30 = scalar_select %p29, 0, %s28
      %s31 = sadd.s32 1, %s22
      %s32 = scalar_select %p29, %s31, %s22
      %p33 = scmp.ge.s32.totalorder %s32, 2
      %s34 = scalar_select %p33, 0, %s32
      %s35 = ssub.s32 %s22, %s34
      %p36 = scmp.eq.s32.totalorder %s35, 0
      %s38 = sadd.s32 %s37, 1
      %s39 = scalar_select %p36, %s37, %s38
      %p42 = pneg %p36
      %p43 = scmp.eq.s32.totalorder %s15, 1
      %p44 = por %p42, %p43
      %p45 = scmp.ne.s32.totalorder %s37, %s40
      %p46 = scmp.eq.s32.totalorder %s15, 0
      %p47 = por %p45, %p46
      %p48 = scmp.ne.s32.totalorder %s37, %s40
      %p49 = scmp.eq.s32.totalorder %s20, 1
      %p50 = por %p48, %p49
      %p51 = scmp.ne.s32.totalorder %s40, %s41
      %p52 = scmp.eq.s32.totalorder %s20, 0
      %p53 = por %p51, %p52
      %p54 = scmp.ne.s32.totalorder %s40, %s41
      %p55 = scmp.eq.s32.totalorder %s21, 1
      %p56 = por %p54, %p55
      %p58 = scmp.ne.s32.totalorder %s41, %s57
      %p59 = scmp.eq.s32.totalorder %s21, 0
      %p60 = por %p58, %p59
      %s61 = ssub.s32 %s23, %s30
      %p62 = scmp.eq.s32.totalorder %s61, 0
      %s64 = sadd.s32 %s63, 1
      %s65 = scalar_select %p62, %s63, %s64
      %p68 = pneg %p62
      %p69 = scmp.eq.s32.totalorder %s15, 1
      %p70 = por %p68, %p69
      %p71 = scmp.ne.s32.totalorder %s63, %s66
      %p72 = scmp.eq.s32.totalorder %s15, 0
      %p73 = por %p71, %p72
      %p74 = scmp.ne.s32.totalorder %s63, %s66
      %p75 = scmp.eq.s32.totalorder %s20, 1
      %p76 = por %p74, %p75
      %p77 = scmp.ne.s32.totalorder %s66, %s67
      %p78 = scmp.eq.s32.totalorder %s20, 0
      %p79 = por %p77, %p78
      %p80 = scmp.ne.s32.totalorder %s66, %s67
      %p81 = scmp.eq.s32.totalorder %s21, 1
      %p82 = por %p80, %p81
      %p84 = scmp.ne.s32.totalorder %s67, %s83
      %p85 = scmp.eq.s32.totalorder %s21, 0
      %p86 = por %p84, %p85
      %s87 = ssub.s32 %s23, %s30
      %p88 = scmp.eq.s32.totalorder %s87, 0
      %s90 = sadd.s32 %s89, 1
      %s91 = scalar_select %p88, %s89, %s90
      %p94 = pneg %p88
      %p95 = scmp.eq.s32.totalorder %s15, 1
      %p96 = por %p94, %p95
      %p97 = scmp.ne.s32.totalorder %s89, %s92
      %p98 = scmp.eq.s32.totalorder %s15, 0
      %p99 = por %p97, %p98
      %p100 = scmp.ne.s32.totalorder %s89, %s92
      %p101 = scmp.eq.s32.totalorder %s20, 1
      %p102 = por %p100, %p101
      %p103 = scmp.ne.s32.totalorder %s92, %s93
      %p104 = scmp.eq.s32.totalorder %s20, 0
      %p105 = por %p103, %p104
      %p106 = scmp.ne.s32.totalorder %s92, %s93
      %p107 = scmp.eq.s32.totalorder %s21, 1
      %p108 = por %p106, %p107
      %p110 = scmp.ne.s32.totalorder %s93, %s109
      %p111 = scmp.eq.s32.totalorder %s21, 0
      %p112 = por %p110, %p111
      %s113 = ssub.s32 %s23, %s30
      %p114 = scmp.eq.s32.totalorder %s113, 0
      %s116 = sadd.s32 %s115, 1
      %s117 = scalar_select %p114, %s115, %s116
      %p120 = pneg %p114
      %p121 = scmp.eq.s32.totalorder %s15, 1
      %p122 = por %p120, %p121
      %p123 = scmp.ne.s32.totalorder %s115, %s118
      %p124 = scmp.eq.s32.totalorder %s15, 0
      %p125 = por %p123, %p124
      %p126 = scmp.ne.s32.totalorder %s115, %s118
      %p127 = scmp.eq.s32.totalorder %s20, 1
      %p128 = por %p126, %p127
      %p129 = scmp.ne.s32.totalorder %s118, %s119
      %p130 = scmp.eq.s32.totalorder %s20, 0
      %p131 = por %p129, %p130
      %p132 = scmp.ne.s32.totalorder %s118, %s119
      %p133 = scmp.eq.s32.totalorder %s21, 1
      %p134 = por %p132, %p133
      %p136 = scmp.ne.s32.totalorder %s119, %s135
      %p137 = scmp.eq.s32.totalorder %s21, 0
      %p138 = por %p136, %p137
      %s140 = sadd.s32 %s139, 1
      %p143 = scmp.eq.s32.totalorder %s15, 1
      %p144 = scmp.ne.s32.totalorder %s139, %s141
      %p145 = scmp.eq.s32.totalorder %s15, 0
      %p146 = por %p144, %p145
      %p147 = scmp.ne.s32.totalorder %s139, %s141
      %p148 = scmp.eq.s32.totalorder %s20, 1
      %p149 = por %p147, %p148
      %p150 = scmp.ne.s32.totalorder %s141, %s142
      %p151 = scmp.eq.s32.totalorder %s20, 0
      %p152 = por %p150, %p151
      %p153 = scmp.ne.s32.totalorder %s141, %s142
      %p154 = scmp.eq.s32.totalorder %s21, 1
      %p155 = por %p153, %p154
      %p157 = scmp.ne.s32.totalorder %s142, %s156
      %p158 = scmp.eq.s32.totalorder %s21, 0
      %p159 = por %p157, %p158
      %s160 = ssub.s32 %s22, %s34
      %p161 = scmp.eq.s32.totalorder %s160, 0
      %s163 = sadd.s32 %s162, 1
      %s164 = scalar_select %p161, %s162, %s163
      %p167 = pneg %p161
      %p168 = scmp.eq.s32.totalorder %s15, 1
      %p169 = por %p167, %p168
      %p170 = scmp.ne.s32.totalorder %s162, %s165
      %p171 = scmp.eq.s32.totalorder %s15, 0
      %p172 = por %p170, %p171
      %p173 = scmp.ne.s32.totalorder %s162, %s165
      %p174 = scmp.eq.s32.totalorder %s20, 1
      %p175 = por %p173, %p174
      %p176 = scmp.ne.s32.totalorder %s165, %s166
      %p177 = scmp.eq.s32.totalorder %s20, 0
      %p178 = por %p176, %p177
      %p179 = scmp.ne.s32.totalorder %s165, %s166
      %p180 = scmp.eq.s32.totalorder %s21, 1
      %p181 = por %p179, %p180
      %p183 = scmp.ne.s32.totalorder %s166, %s182
      %p184 = scmp.eq.s32.totalorder %s21, 0
      %p185 = por %p183, %p184
      %p186 = scmp.le.s32.totalorder 1, %s15
      %p187 = scmp.lt.s32.totalorder %s15, 3
      %p188 = pnand %p186, %p187
      %p189 = pneg %p188
      // Predicated region
      $region9: #{linear_transform_sublayer.1} parent=5 // pred_check
        _
      $region10: #{linear_transform_sublayer.1} parent=5 // pred_check_branch
        %191 = sbr.rel (%p188) target = $region12
      $region11: #{linear_transform_sublayer.1} parent=5 // pred_region
        %s192 = ssub.s32 %s15, 1
        // Predicated region
        $region13: #{linear_transform_sublayer.1} parent=11 // pred_check
          %p193 = pneg %p79
        $region14: #{linear_transform_sublayer.1} parent=11 // pred_check_branch
          %195 = sbr.rel (%p193) target = $region16
        $region15: #{linear_transform_sublayer.1} parent=11 // pred_region
          %s197 = ssub.s32 256, 256
          %198 = vsyncadd [#allocation6], %s197
          %s199 = smul.addr %s25, 64
          %s200 = scalar_lea.hbm %s1, %s199
          %s201 = sshll.u32 [#allocation5], 4
          %s202 = int_to_ptr.vmem [resolvable:$true] %s201
          %207 = dma.hbm_to_vmem [thread:$0]  %s200, 256, %s202, [#allocation6], 64, 64, 4
        $region16: #{linear_transform_sublayer.1} parent=11 // pred_fallthru
          _
        // Predicated region
        $region17: #{linear_transform_sublayer.1} parent=11 // pred_check
          %p208 = pneg %p105
        $region18: #{linear_transform_sublayer.1} parent=11 // pred_check_branch
          %210 = sbr.rel (%p208) target = $region20
        $region19: #{linear_transform_sublayer.1} parent=11 // pred_region
          %p211 = scmp.lt.s32.totalorder %s25, 0
          %s212 = scalar_select %p211, %s25, 0
          %s213 = scalar_lea.vmem %s2, %s212
        $region20: #{linear_transform_sublayer.1} parent=11 // pred_fallthru
          _
        // Predicated region
        $region21: #{linear_transform_sublayer.1} parent=11 // pred_check
          %p214 = pneg %p131
        $region22: #{linear_transform_sublayer.1} parent=11 // pred_check_branch
          %216 = sbr.rel (%p214) target = $region24
        $region23: #{linear_transform_sublayer.1} parent=11 // pred_region
          %s217 = smul.u32 16, %s25
          %s219 = ssub.s32 1024, 1024
          %220 = vsyncadd [#allocation6], %s219
          %s221 = smul.addr %s217, 64
          %s222 = scalar_lea.hbm %s3, %s221
          %s223 = sshll.u32 [#allocation7], 4
          %s224 = int_to_ptr.vmem [resolvable:$true] %s223
          %229 = dma.hbm_to_vmem [thread:$0]  %s222, 1024, %s224, [#allocation6], 64, 64, 4
        $region24: #{linear_transform_sublayer.1} parent=11 // pred_fallthru
          _
        // Predicated region
        $region25: #{linear_transform_sublayer.1} parent=11 // pred_check
          %p230 = pneg %p152
        $region26: #{linear_transform_sublayer.1} parent=11 // pred_check_branch
          %232 = sbr.rel (%p230) target = $region28
        $region27: #{linear_transform_sublayer.1} parent=11 // pred_region
          _
        $region28: #{linear_transform_sublayer.1} parent=11 // pred_fallthru
          _
      $region12: #{linear_transform_sublayer.1} parent=5 // pred_fallthru
        _
      %p233 = scmp.lt.s32.totalorder %s15, 2
      // Predicated region
      $region29: #{linear_transform_sublayer.1} parent=5 // pred_check
        %p234 = pneg %p233
      $region30: #{linear_transform_sublayer.1} parent=5 // pred_check_branch
        %236 = sbr.rel (%p234) target = $region32
      $region31: #{linear_transform_sublayer.1} parent=5 // pred_region
        // Predicated region
        $region33: #{linear_transform_sublayer.1} parent=31 // pred_check
          %p237 = pneg %p47
        $region34: #{linear_transform_sublayer.1} parent=31 // pred_check_branch
          %239 = sbr.rel (%p237) target = $region36
        $region35: #{linear_transform_sublayer.1} parent=31 // pred_region
          %s240 = sand.u32 %s37, 1
          %s241 = scalar_lea.sflag [#allocation4], %s240
          %s242 = sand.u32 %s37, 1
          %s243 = smul.addr %s242, 8
          %s244 = scalar_lea.vmem [#allocation3], %s243
          %s246 = ssub.s32 128, 128
          %247 = vsyncadd %s241, %s246
          %s248 = smul.addr %s22, 128
          %s249 = scalar_lea.hbm %s0, %s248
          %s251 = sshll.u32 %s244, 4
          %s252 = int_to_ptr.vmem [resolvable:$true] %s251
          %254 = dma.hbm_to_vmem [thread:$0]  %s249, 128, %s252, %s241
        $region36: #{linear_transform_sublayer.1} parent=31 // pred_fallthru
          _
      $region32: #{linear_transform_sublayer.1} parent=5 // pred_fallthru
        _
      %p255 = scmp.le.s32.totalorder 1, %s15
      %p256 = scmp.lt.s32.totalorder %s15, 3
      %p257 = pnand %p255, %p256
      %p258 = pneg %p257
      // Predicated region
      $region37: #{linear_transform_sublayer.1} parent=5 // pred_check
        _
      $region38: #{linear_transform_sublayer.1} parent=5 // pred_check_branch
        %260 = sbr.rel (%p257) target = $region40
      $region39: #{linear_transform_sublayer.1} parent=5 // pred_region
        %s261 = ssub.s32 %s15, 1
        %s262 = sand.u32 %s40, 1
        %s263 = scalar_lea.sflag [#allocation4], %s262
        %s264 = sand.u32 %s40, 1
        %s265 = smul.addr %s264, 8
        %s266 = scalar_lea.vmem [#allocation3], %s265
        // Predicated region
        $region41: #{linear_transform_sublayer.1} parent=39 // pred_check
          %p267 = pneg %p53
        $region42: #{linear_transform_sublayer.1} parent=39 // pred_check_branch
          %269 = sbr.rel (%p267) target = $region44
        $region43: #{linear_transform_sublayer.1} parent=39 // pred_region
          %270 = dma.done %s263, 128
        $region44: #{linear_transform_sublayer.1} parent=39 // pred_fallthru
          _
        // Predicated region
        $region45: #{linear_transform_sublayer.1} parent=39 // pred_check
          %p271 = pneg %p79
        $region46: #{linear_transform_sublayer.1} parent=39 // pred_check_branch
          %273 = sbr.rel (%p271) target = $region48
        $region47: #{linear_transform_sublayer.1} parent=39 // pred_region
          %274 = dma.done [#allocation6], 256
        $region48: #{linear_transform_sublayer.1} parent=39 // pred_fallthru
          _
        // Predicated region
        $region49: #{linear_transform_sublayer.1} parent=39 // pred_check
          %p275 = pneg %p131
        $region50: #{linear_transform_sublayer.1} parent=39 // pred_check_branch
          %277 = sbr.rel (%p275) target = $region52
        $region51: #{linear_transform_sublayer.1} parent=39 // pred_region
          %278 = dma.done [#allocation6], 1024
        $region52: #{linear_transform_sublayer.1} parent=39 // pred_fallthru
          _
        %s279 = sand.u32 %s40, 1
        %s280 = scalar_lea.sflag [#allocation4], %s279
        %s281 = sand.u32 %s40, 1
        %s282 = smul.addr %s281, 8
        %s283 = scalar_lea.vmem [#allocation3], %s282
        %p284 = pneg %p53
        %p285 = pneg %p50
        %p286 = pneg %p79
        %p287 = pneg %p76
        %p288 = scmp.lt.s32.totalorder %s25, 0
        %s289 = scalar_select %p288, %s25, 0
        %s290 = scalar_lea.vmem %s2, %s289
        %p291 = pneg %p105
        %p292 = pneg %p102
        %p293 = pneg %p131
        %p294 = pneg %p128
        %p295 = pneg %p152
        %p296 = pneg %p149
        %p297 = pneg %p178
        %p298 = pneg %p175
        %p299 = scmp.lt.s32.totalorder %s24, 1
        %s300 = scalar_select %p299, %s24, 1
        %s301 = smul.addr %s300, 8
        %s302 = scalar_lea.vmem %s5, %s301
        %p303 = scmp.lt.s32.totalorder %s25, 0
        %s304 = scalar_select %p303, %s25, 0
        %s305 = scalar_lea.vmem %s2, %s304
        %s306 = smul.u32 16, %s25
        %p307 = scmp.lt.s32.totalorder %s24, 1
        %s308 = scalar_select %p307, %s24, 1
        %s309 = smul.addr %s308, 8
        %s310 = scalar_lea.vmem %s5, %s309
        %p312 = scmp.eq.s32.totalorder %s25, 0
        // Predicated region
        $region53: #{linear_transform_sublayer.1} parent=39 // pred_check
          %p313 = pneg %p312
        $region54: #{linear_transform_sublayer.1} parent=39 // pred_check_branch
          %315 = sbr.rel (%p313) target = $region56
        $region55: #{linear_transform_sublayer.1} parent=39 // pred_region
          %316 = vst [vmem:[#allocation2] sm:$0xff] 0.0
        $region56: #{linear_transform_sublayer.1} parent=39 // pred_fallthru
          _
        %v317 = vld [vmem:[%s266] sm:$0xff]
        %v318 = vpack.c.bf16 %v317, %v317
        %v319 = vld [vmem:[#allocation5] sm:$0xf]
        %v320 = vld [vmem:[#allocation5 + $0x4] sm:$0xf]
        %v321 = vld [vmem:[#allocation5 + $0x8] sm:$0xf]
        %v322 = vld [vmem:[#allocation5 + $0xc] sm:$0xf]
        %v323 = vld [vmem:[%s305] sm:$0x1]
        %v325 = vlaneseq
        %v326 = vshrl.u32 %v325, 7
        %v327 = vsub.s32 0, %v326
        %v328 = vrot.slane %v323, %v327
        %v334 = vunpack.c.l.b16 %v319
        %v335 = vunpack.c.l.b16 %v320
        %v336 = vunpack.c.l.b16 %v321
        %v337 = vunpack.c.l.b16 %v322
        %v338 = vpack.c.b16 %v335, %v334
        %v339 = vpack.c.b16 %v337, %v336
        %vm342 = vcmask 261120
        %v344 = vsel %vm342, %v318, 0
        %346 = vmatprep.subr.bf16.mxu0 0
        %347 = vmatpush1.bf16.msra.mxu0 %v338
        %348 = vmatprep.subr.bf16.mxu0 0
        %349 = vmatpush1.bf16.msra.mxu0 %v339
        %350 = vmatprep.subr.bf16.mxu0 0
        %351 = vmatpush1.bf16.msra.mxu0 0
        %352 = vmatprep.subr.bf16.mxu0 0
        %353 = vmatpush1.bf16.msra.mxu0 0
        %354 = vmatprep.subr.bf16.mxu0 0
        %355 = vmatpush1.bf16.msra.mxu0 0
        %356 = vmatprep.subr.bf16.mxu0 0
        %357 = vmatpush1.bf16.msra.mxu0 0
        %358 = vmatprep.subr.bf16.mxu0 0
        %359 = vmatpush1.bf16.msra.mxu0 0
        %360 = vmatprep.subr.bf16.mxu0 0
        %361 = vmatpush1.bf16.msra.mxu0 0
        %362 = vmatprep.subr.bf16.mxu0 0
        %363 = vmatpush1.bf16.msra.mxu0 0
        %364 = vmatprep.subr.bf16.mxu0 0
        %365 = vmatpush1.bf16.msra.mxu0 0
        %366 = vmatprep.subr.bf16.mxu0 0
        %367 = vmatpush1.bf16.msra.mxu0 0
        %368 = vmatprep.subr.bf16.mxu0 0
        %369 = vmatpush1.bf16.msra.mxu0 0
        %370 = vmatprep.subr.bf16.mxu0 0
        %371 = vmatpush1.bf16.msra.mxu0 0
        %372 = vmatprep.subr.bf16.mxu0 0
        %373 = vmatpush1.bf16.msra.mxu0 0
        %374 = vmatprep.subr.bf16.mxu0 0
        %375 = vmatpush1.bf16.msra.mxu0 0
        %376 = vmatprep.subr.bf16.mxu0 0
        %377 = vmatpush1.bf16.msra.mxu0 0
        %378 = vmatprep.mubr.bf16.mxu0 0
        %379 = vmatmul.mubr.bf16.gmra.mrb[0].mxu0 %v344
        %v380 = vpop.f32.mrb[0].mxu0
        %v381 = vadd.f32 %v328, %v380
        %v382 = vpop.f32.mrb[0].mxu0
        %v383 = vpop.f32.mrb[0].mxu0
        %v384 = vpop.f32.mrb[0].mxu0
        %385 = vdwg.mxu0
        %v386 = vmax.f32 %v381, 0.0
        %v387 = vld [vmem:[#allocation2] sm:$0xff]
        %v388 = vpack.c.bf16 %v386, %v386
        %v389 = vld [vmem:[#allocation7] sm:$0xf]
        %v390 = vld [vmem:[#allocation7 + $0x4] sm:$0xf]
        %v391 = vld [vmem:[#allocation7 + $0x8] sm:$0xf]
        %v392 = vld [vmem:[#allocation7 + $0xc] sm:$0xf]
        %v393 = vld [vmem:[#allocation7 + $0x10] sm:$0xf]
        %v394 = vld [vmem:[#allocation7 + $0x14] sm:$0xf]
        %v395 = vld [vmem:[#allocation7 + $0x18] sm:$0xf]
        %v396 = vld [vmem:[#allocation7 + $0x1c] sm:$0xf]
        %v397 = vld [vmem:[#allocation7 + $0x20] sm:$0xf]
        %v398 = vld [vmem:[#allocation7 + $0x24] sm:$0xf]
        %v399 = vld [vmem:[#allocation7 + $0x28] sm:$0xf]
        %v400 = vld [vmem:[#allocation7 + $0x2c] sm:$0xf]
        %v401 = vld [vmem:[#allocation7 + $0x30] sm:$0xf]
        %v402 = vld [vmem:[#allocation7 + $0x34] sm:$0xf]
        %v403 = vld [vmem:[#allocation7 + $0x38] sm:$0xf]
        %v404 = vld [vmem:[#allocation7 + $0x3c] sm:$0xf]
        %v421 = vunpack.c.l.b16 %v389
        %v422 = vunpack.c.l.b16 %v390
        %v423 = vunpack.c.l.b16 %v391
        %v424 = vunpack.c.l.b16 %v392
        %v425 = vunpack.c.l.b16 %v393
        %v426 = vunpack.c.l.b16 %v394
        %v427 = vunpack.c.l.b16 %v395
        %v428 = vunpack.c.l.b16 %v396
        %v429 = vunpack.c.l.b16 %v397
        %v430 = vunpack.c.l.b16 %v398
        %v431 = vunpack.c.l.b16 %v399
        %v432 = vunpack.c.l.b16 %v400
        %v433 = vunpack.c.l.b16 %v401
        %v434 = vunpack.c.l.b16 %v402
        %v435 = vunpack.c.l.b16 %v403
        %v436 = vunpack.c.l.b16 %v404
        %v437 = vpack.c.b16 %v422, %v421
        %v438 = vpack.c.b16 %v424, %v423
        %v439 = vpack.c.b16 %v426, %v425
        %v440 = vpack.c.b16 %v428, %v427
        %v441 = vpack.c.b16 %v430, %v429
        %v442 = vpack.c.b16 %v432, %v431
        %v443 = vpack.c.b16 %v434, %v433
        %v444 = vpack.c.b16 %v436, %v435
        %453 = vmatprep.subr.bf16.mxu0 0
        %454 = vmatpush1.bf16.msra.mxu0 %v437
        %455 = vmatprep.subr.bf16.mxu0 0
        %456 = vmatpush1.bf16.msra.mxu0 %v438
        %457 = vmatprep.subr.bf16.mxu0 0
        %458 = vmatpush1.bf16.msra.mxu0 %v439
        %459 = vmatprep.subr.bf16.mxu0 0
        %460 = vmatpush1.bf16.msra.mxu0 %v440
        %461 = vmatprep.subr.bf16.mxu0 0
        %462 = vmatpush1.bf16.msra.mxu0 %v441
        %463 = vmatprep.subr.bf16.mxu0 0
        %464 = vmatpush1.bf16.msra.mxu0 %v442
        %465 = vmatprep.subr.bf16.mxu0 0
        %466 = vmatpush1.bf16.msra.mxu0 %v443
        %467 = vmatprep.subr.bf16.mxu0 0
        %468 = vmatpush1.bf16.msra.mxu0 %v444
        %469 = vmatprep.subr.bf16.mxu0 0
        %470 = vmatpush1.bf16.msra.mxu0 0
        %471 = vmatprep.subr.bf16.mxu0 0
        %472 = vmatpush1.bf16.msra.mxu0 0
        %473 = vmatprep.subr.bf16.mxu0 0
        %474 = vmatpush1.bf16.msra.mxu0 0
        %475 = vmatprep.subr.bf16.mxu0 0
        %476 = vmatpush1.bf16.msra.mxu0 0
        %477 = vmatprep.subr.bf16.mxu0 0
        %478 = vmatpush1.bf16.msra.mxu0 0
        %479 = vmatprep.subr.bf16.mxu0 0
        %480 = vmatpush1.bf16.msra.mxu0 0
        %481 = vmatprep.subr.bf16.mxu0 0
        %482 = vmatpush1.bf16.msra.mxu0 0
        %483 = vmatprep.subr.bf16.mxu0 0
        %484 = vmatpush1.bf16.msra.mxu0 0
        %485 = vmatprep.mubr.bf16.mxu0 0
        %486 = vmatmul.mubr.bf16.gmra.mrb[0].mxu0 %v388
        %v487 = vpop.f32.mrb[0].mxu0
        %v488 = vadd.f32 0.0, %v487
        %v489 = vpop.f32.mrb[0].mxu0
        %v490 = vpop.f32.mrb[0].mxu0
        %v491 = vpop.f32.mrb[0].mxu0
        %492 = vdwg.mxu0
        %v493 = vadd.f32 %v387, %v488
        %494 = vst [vmem:[#allocation2] sm:$0xff] %v493
        // Predicated region
        $region57: #{linear_transform_sublayer.1} parent=39 // pred_check
          %p495 = pneg %p312
        $region58: #{linear_transform_sublayer.1} parent=39 // pred_check_branch
          %497 = sbr.rel (%p495) target = $region60
        $region59: #{linear_transform_sublayer.1} parent=39 // pred_region
          %v498 = vld [vmem:[#allocation2] sm:$0xff]
          %v499 = vld [vmem:[%s4] sm:$0x1]
          %v501 = vlaneseq
          %v502 = vshrl.u32 %v501, 7
          %v503 = vsub.s32 0, %v502
          %v504 = vrot.slane %v499, %v503
          %v506 = vadd.f32 %v498, %v504
          %507 = vst [vmem:[%s310] sm:$0xff] %v506
        $region60: #{linear_transform_sublayer.1} parent=39 // pred_fallthru
          _
        %p508 = scmp.lt.s32.totalorder %s24, 1
        %s509 = scalar_select %p508, %s24, 1
        %s510 = smul.addr %s509, 8
        %s511 = scalar_lea.vmem %s5, %s510
        // Predicated region
        $region61: #{linear_transform_sublayer.1} parent=39 // pred_check
          %p512 = pneg %p175
        $region62: #{linear_transform_sublayer.1} parent=39 // pred_check_branch
          %514 = sbr.rel (%p512) target = $region64
        $region63: #{linear_transform_sublayer.1} parent=39 // pred_region
          _
        $region64: #{linear_transform_sublayer.1} parent=39 // pred_fallthru
          _
      $region40: #{linear_transform_sublayer.1} parent=5 // pred_fallthru
        _
      %p515 = scmp.le.s32.totalorder 2, %s15
      // Predicated region
      $region65: #{linear_transform_sublayer.1} parent=5 // pred_check
        %p516 = pneg %p515
      $region66: #{linear_transform_sublayer.1} parent=5 // pred_check_branch
        %518 = sbr.rel (%p516) target = $region68
      $region67: #{linear_transform_sublayer.1} parent=5 // pred_region
        %s519 = ssub.s32 %s15, 2
        // Predicated region
        $region69: #{linear_transform_sublayer.1} parent=67 // pred_check
          %p520 = pneg %p181
        $region70: #{linear_transform_sublayer.1} parent=67 // pred_check_branch
          %522 = sbr.rel (%p520) target = $region72
        $region71: #{linear_transform_sublayer.1} parent=67 // pred_region
          %p523 = scmp.lt.s32.totalorder %s26, 1
          %s524 = scalar_select %p523, %s26, 1
          %s525 = smul.addr %s524, 8
          %s526 = scalar_lea.vmem %s5, %s525
        $region72: #{linear_transform_sublayer.1} parent=67 // pred_fallthru
          _
      $region68: #{linear_transform_sublayer.1} parent=5 // pred_fallthru
        _
    $region6: #{linear_transform_sublayer.1} parent=1 // loop_footer
      %s19 = sadd.s32 1, %s15
    $region7: #{linear_transform_sublayer.1} parent=1 // loop_footer_branch
      %14 = sbr.rel target = $region3
    $region8: #{linear_transform_sublayer.1} parent=1 // loop_exit
      _
    %527 = vsyncpa [#allocation4], 1
    %s528 = scalar_lea.sflag [#allocation4], 1
    %529 = vsyncpa %s528, 1
    %530 = vsyncpa [#allocation6], 1

</llo_original>
